<compile_context>
chip_gen: v7x
topology: tpu7x:2x2x1
jax: 0.10.0
libtpu: 0.0.40
codegen_flags: <defaults>
</compile_context>

<pallas_src>
import jax
import jax.numpy as jnp
import numpy as np
from jax.experimental import pallas as pl
from jax.experimental.pallas import tpu as pltpu


def coord_att_kernel(x_ref, poolh_ref, poolw_ref, w1_ref, bnb_ref,
                     wh_ref, ww_ref, exph_ref, expw_ref, o_ref):
    f32 = jnp.float32
    x = x_ref[...].astype(f32)                                        # (B*C, H*W)

    # Adaptive average pools as MXU matmuls over the flattened (lane) axis:
    #   pooled_h[r, h] = mean_w x[r, h*W + w],  pooled_w[r, w] = mean_h x[r, h*W + w]
    pooled_h = jnp.dot(x, poolh_ref[...], preferred_element_type=f32)  # (B*C, H)
    pooled_w = jnp.dot(x, poolw_ref[...], preferred_element_type=f32)  # (B*C, W)

    # conv1 (1x1, bias-free, BN scale pre-folded) applied to the H and W
    # branches separately (no lane-axis concat/split).  The weight is block-
    # diagonal over the B_blk images in this tile, so the per-image channel mix
    # stays a plain 2-D matmul (no in-kernel reshapes/transposes).
    w1 = w1_ref[...]                                                   # (B*mid, B*C)
    bnb = bnb_ref[...]                                                 # (B*mid, 1)
    yh = jnp.dot(w1, pooled_h, preferred_element_type=f32) + bnb       # (B*mid, H)
    yw = jnp.dot(w1, pooled_w, preferred_element_type=f32) + bnb       # (B*mid, W)
    # h_sigmoid = relu6(x + 3) / 6
    yh = jnp.clip(yh + 3.0, 0.0, 6.0) * (1.0 / 6.0)
    yw = jnp.clip(yw + 3.0, 0.0, 6.0) * (1.0 / 6.0)

    # conv_h / conv_w (1x1, block-diagonal over images) + sigmoid gates.
    att_h = jax.nn.sigmoid(jnp.dot(wh_ref[...], yh, preferred_element_type=f32))  # (B*C, H)
    att_w = jax.nn.sigmoid(jnp.dot(ww_ref[...], yw, preferred_element_type=f32))  # (B*C, W)

    # Broadcast the gates back over the lane-dense H*W axis with constant 0/1
    # expansion matrices (MXU), keeping the final store unmasked and relayout-free.
    fac_h = jnp.dot(att_h, exph_ref[...], preferred_element_type=f32)  # (B*C, H*W)
    fac_w = jnp.dot(att_w, expw_ref[...], preferred_element_type=f32)  # (B*C, H*W)

    o_ref[...] = (x * fac_h * fac_w).astype(o_ref.dtype)


def _pick_block_batch(n, c, s, itemsize, target_bytes):
    """Largest divisor b of n with a (b*c, s) tile <= target_bytes whose row
    count is sublane-aligned (multiple of 8) or covers the full array."""
    per_image = c * s * itemsize
    cap = max(1, target_bytes // per_image)
    best = None
    for b in range(1, n + 1):
        if n % b != 0 or b > cap:
            continue
        if (b * c) % 8 == 0 or b == n:
            best = b
    return best if best is not None else n


def coord_att(x, w1, bn_scale, bn_bias, wh, ww, *, target_block_bytes=2 << 20):
    N, C, H, W = x.shape
    S = H * W
    mid = w1.shape[0]
    f32 = jnp.float32

    b_blk = _pick_block_batch(N, C, S, jnp.dtype(x.dtype).itemsize, target_block_bytes)
    grid = (N // b_blk,)
    rows = b_blk * C

    # Fold the eval-mode BN scale into conv1's weight (per output channel).
    w1f = bn_scale.reshape(mid, 1).astype(f32) * w1.astype(f32)

    # Replicate the channel-mixing weights block-diagonally across the b_blk
    # images of one tile -> per-image 1x1 convs stay single 2-D matmuls.
    # (These matmuls are tiny compared to the pooling/expansion ones, so the
    # zero padding is negligible.)
    eye_b = jnp.eye(b_blk, dtype=f32)
    w1bd = jnp.kron(eye_b, w1f)                                  # (b*mid, b*C)
    whbd = jnp.kron(eye_b, wh.astype(f32))                       # (b*C, b*mid)
    wwbd = jnp.kron(eye_b, ww.astype(f32))                       # (b*C, b*mid)
    bnbd = jnp.tile(bn_bias.reshape(mid, 1).astype(f32), (b_blk, 1))  # (b*mid, 1)

    # Constant pooling (mean over W / over H) and expansion (broadcast back over
    # the flattened H*W axis) matrices; s = h*W + w.
    eye_h = jnp.eye(H, dtype=f32)
    eye_w = jnp.eye(W, dtype=f32)
    pool_h = jnp.repeat(eye_h, W, axis=0) / float(W)             # (S, H)
    pool_w = jnp.tile(eye_w, (H, 1)) / float(H)                  # (S, W)
    exp_h = jnp.repeat(eye_h, W, axis=1)                         # (H, S)
    exp_w = jnp.tile(eye_w, (1, H))                              # (W, S)

    # Free, row-major metadata reshape: lane-dense layout for the kernel.
    x2 = x.reshape(N * C, S)

    out2 = pl.pallas_call(
        coord_att_kernel,
        out_shape=jax.ShapeDtypeStruct((N * C, S), x.dtype),
        grid=grid,
        in_specs=[
            pl.BlockSpec((rows, S), lambda n: (n, 0)),            # x
            pl.BlockSpec((S, H), lambda n: (0, 0)),               # pool_h
            pl.BlockSpec((S, W), lambda n: (0, 0)),               # pool_w
            pl.BlockSpec((b_blk * mid, rows), lambda n: (0, 0)),  # w1 (block-diag)
            pl.BlockSpec((b_blk * mid, 1), lambda n: (0, 0)),     # bn bias
            pl.BlockSpec((rows, b_blk * mid), lambda n: (0, 0)),  # wh (block-diag)
            pl.BlockSpec((rows, b_blk * mid), lambda n: (0, 0)),  # ww (block-diag)
            pl.BlockSpec((H, S), lambda n: (0, 0)),               # exp_h
            pl.BlockSpec((W, S), lambda n: (0, 0)),               # exp_w
        ],
        out_specs=pl.BlockSpec((rows, S), lambda n: (n, 0)),
        compiler_params=pltpu.CompilerParams(
            dimension_semantics=("parallel",),
            vmem_limit_bytes=64 * 1024 * 1024,
        ),
    )(x2, pool_h, pool_w, w1bd, bnbd, whbd, wwbd, exp_h, exp_w)

    return out2.reshape(N, C, H, W)


def coord_att_reference(x, w1, bn_scale, bn_bias, wh, ww):
    """Pure-JAX reference mirroring the PyTorch forward (eval-mode BN)."""
    pooled_h = jnp.mean(x, axis=3)                      # (N, C, H)
    pooled_w = jnp.mean(x, axis=2)                      # (N, C, W)
    y = jnp.concatenate([pooled_h, pooled_w], axis=2)   # (N, C, H+W)
    y = jnp.einsum("mc,ncs->nms", w1, y)                # (N, mid, H+W)
    y = y * bn_scale.reshape(1, -1, 1) + bn_bias.reshape(1, -1, 1)
    y = jnp.clip(y + 3.0, 0.0, 6.0) / 6.0
    H = x.shape[2]
    yh, yw = y[:, :, :H], y[:, :, H:]
    att_h = jax.nn.sigmoid(jnp.einsum("cm,nms->ncs", wh, yh))  # (N, C, H)
    att_w = jax.nn.sigmoid(jnp.einsum("cm,nms->ncs", ww, yw))  # (N, C, W)
    return x * att_h[:, :, :, None] * att_w[:, :, None, :]


if __name__ == "__main__":
    N, C, H, W = 2, 4, 16, 16
    reduction = 32
    mid = max(C // reduction, 8)

    key = jax.random.PRNGKey(0)
    kx, k1, k2, k3, kg, kb, km, kv = jax.random.split(key, 8)

    x = jax.random.normal(kx, (N, C, H, W), dtype=jnp.float32)

    # 1x1 conv weights -> plain matrices over channels, kaiming-ish scale.
    w1 = jax.random.normal(k1, (mid, C), dtype=jnp.float32) / np.sqrt(C)
    wh = jax.random.normal(k2, (C, mid), dtype=jnp.float32) / np.sqrt(mid)
    ww = jax.random.normal(k3, (C, mid), dtype=jnp.float32) / np.sqrt(mid)

    # BatchNorm2d (eval mode): fold gamma/beta/running stats into scale & bias.
    gamma = 1.0 + 0.1 * jax.random.normal(kg, (mid,), dtype=jnp.float32)
    beta = 0.1 * jax.random.normal(kb, (mid,), dtype=jnp.float32)
    running_mean = 0.1 * jax.random.normal(km, (mid,), dtype=jnp.float32)
    running_var = jnp.abs(1.0 + 0.1 * jax.random.normal(kv, (mid,), dtype=jnp.float32))
    eps = 1e-5
    inv_std = 1.0 / jnp.sqrt(running_var + eps)
    bn_scale = gamma * inv_std
    bn_bias = beta - running_mean * gamma * inv_std

    out = coord_att(x, w1, bn_scale, bn_bias, wh, ww)
    out = jax.block_until_ready(out)

    ref = coord_att_reference(x, w1, bn_scale, bn_bias, wh, ww)
    # Tolerance allows for MXU f32 multi-pass rounding in the pooling/broadcast
    # matmuls vs. the reference's exact mean/broadcast.
    np.testing.assert_allclose(np.asarray(out), np.asarray(ref), rtol=1e-4, atol=1e-4)

    print("KERNEL_OK")
</pallas_src>

<mosaic_0001>
module attributes {stable_mosaic.version = 11 : i64} {
  func.func @coord_att_kernel(%arg0: i32, %arg1: memref<8x256xf32, #tpu.memory_space<vmem>>, %arg2: memref<256x16xf32, #tpu.memory_space<vmem>>, %arg3: memref<256x16xf32, #tpu.memory_space<vmem>>, %arg4: memref<16x8xf32, #tpu.memory_space<vmem>>, %arg5: memref<16x1xf32, #tpu.memory_space<vmem>>, %arg6: memref<8x16xf32, #tpu.memory_space<vmem>>, %arg7: memref<8x16xf32, #tpu.memory_space<vmem>>, %arg8: memref<16x256xf32, #tpu.memory_space<vmem>>, %arg9: memref<16x256xf32, #tpu.memory_space<vmem>>, %arg10: memref<8x256xf32, #tpu.memory_space<vmem>>) attributes {dimension_semantics = [#tpu.dimension_semantics<parallel>], iteration_bounds = array<i64: 1>, scalar_prefetch = 0 : i64, scratch_operands = 0 : i64, tpu.core_type = #tpu.core_type<tc>, window_params = [{transform_indices = @transform_0, window_bounds = array<i64: 8, 256>}, {pipeline_mode = #tpu.pipeline_mode<synchronous>, transform_indices = @transform_1, window_bounds = array<i64: 256, 16>}, {pipeline_mode = #tpu.pipeline_mode<synchronous>, transform_indices = @transform_2, window_bounds = array<i64: 256, 16>}, {pipeline_mode = #tpu.pipeline_mode<synchronous>, transform_indices = @transform_3, window_bounds = array<i64: 16, 8>}, {pipeline_mode = #tpu.pipeline_mode<synchronous>, transform_indices = @transform_4, window_bounds = array<i64: 16, 1>}, {pipeline_mode = #tpu.pipeline_mode<synchronous>, transform_indices = @transform_5, window_bounds = array<i64: 8, 16>}, {pipeline_mode = #tpu.pipeline_mode<synchronous>, transform_indices = @transform_6, window_bounds = array<i64: 8, 16>}, {pipeline_mode = #tpu.pipeline_mode<synchronous>, transform_indices = @transform_7, window_bounds = array<i64: 16, 256>}, {pipeline_mode = #tpu.pipeline_mode<synchronous>, transform_indices = @transform_8, window_bounds = array<i64: 16, 256>}, {transform_indices = @transform_9, window_bounds = array<i64: 8, 256>}]} {
    %c0 = arith.constant 0 : index
    %c0_0 = arith.constant 0 : index
    %0 = vector.load %arg1[%c0, %c0_0] : memref<8x256xf32, #tpu.memory_space<vmem>>, vector<8x256xf32>
    %c0_1 = arith.constant 0 : index
    %c0_2 = arith.constant 0 : index
    %1 = vector.load %arg2[%c0_1, %c0_2] : memref<256x16xf32, #tpu.memory_space<vmem>>, vector<256x16xf32>
    %cst = arith.constant dense<0.000000e+00> : vector<8x16xf32>
    %2 = tpu.matmul %0, %1, %cst {dimension_numbers = #tpu.dot_dimension_numbers<[1], [0], [0], [1], [0, 0, 1, 1], [], []>} : vector<8x256xf32>, vector<256x16xf32>, vector<8x16xf32> -> vector<8x16xf32>
    %c0_3 = arith.constant 0 : index
    %c0_4 = arith.constant 0 : index
    %3 = vector.load %arg3[%c0_3, %c0_4] : memref<256x16xf32, #tpu.memory_space<vmem>>, vector<256x16xf32>
    %cst_5 = arith.constant dense<0.000000e+00> : vector<8x16xf32>
    %4 = tpu.matmul %0, %3, %cst_5 {dimension_numbers = #tpu.dot_dimension_numbers<[1], [0], [0], [1], [0, 0, 1, 1], [], []>} : vector<8x256xf32>, vector<256x16xf32>, vector<8x16xf32> -> vector<8x16xf32>
    %c0_6 = arith.constant 0 : index
    %c0_7 = arith.constant 0 : index
    %5 = vector.load %arg4[%c0_6, %c0_7] : memref<16x8xf32, #tpu.memory_space<vmem>>, vector<16x8xf32>
    %c0_8 = arith.constant 0 : index
    %c0_9 = arith.constant 0 : index
    %6 = vector.load %arg5[%c0_8, %c0_9] : memref<16x1xf32, #tpu.memory_space<vmem>>, vector<16x1xf32>
    %cst_10 = arith.constant dense<0.000000e+00> : vector<16x16xf32>
    %7 = tpu.matmul %5, %2, %cst_10 {dimension_numbers = #tpu.dot_dimension_numbers<[1], [0], [0], [1], [0, 0, 1, 1], [], []>} : vector<16x8xf32>, vector<8x16xf32>, vector<16x16xf32> -> vector<16x16xf32>
    %8 = vector.broadcast %6 : vector<16x1xf32> to vector<16x16xf32>
    %9 = arith.addf %7, %8 : vector<16x16xf32>
    %cst_11 = arith.constant dense<0.000000e+00> : vector<16x16xf32>
    %10 = tpu.matmul %5, %4, %cst_11 {dimension_numbers = #tpu.dot_dimension_numbers<[1], [0], [0], [1], [0, 0, 1, 1], [], []>} : vector<16x8xf32>, vector<8x16xf32>, vector<16x16xf32> -> vector<16x16xf32>
    %11 = vector.broadcast %6 : vector<16x1xf32> to vector<16x16xf32>
    %12 = arith.addf %10, %11 : vector<16x16xf32>
    %cst_12 = arith.constant 3.000000e+00 : f32
    %13 = vector.broadcast %cst_12 : f32 to vector<16x16xf32>
    %14 = arith.addf %9, %13 : vector<16x16xf32>
    %cst_13 = arith.constant 0.000000e+00 : f32
    %cst_14 = arith.constant 6.000000e+00 : f32
    %15 = vector.broadcast %cst_13 : f32 to vector<16x16xf32>
    %16 = arith.maximumf %15, %14 : vector<16x16xf32>
    %17 = vector.broadcast %cst_14 : f32 to vector<16x16xf32>
    %18 = arith.minimumf %17, %16 : vector<16x16xf32>
    %cst_15 = arith.constant 0.166666672 : f32
    %19 = vector.broadcast %cst_15 : f32 to vector<16x16xf32>
    %20 = arith.mulf %18, %19 : vector<16x16xf32>
    %cst_16 = arith.constant 3.000000e+00 : f32
    %21 = vector.broadcast %cst_16 : f32 to vector<16x16xf32>
    %22 = arith.addf %12, %21 : vector<16x16xf32>
    %cst_17 = arith.constant 0.000000e+00 : f32
    %cst_18 = arith.constant 6.000000e+00 : f32
    %23 = vector.broadcast %cst_17 : f32 to vector<16x16xf32>
    %24 = arith.maximumf %23, %22 : vector<16x16xf32>
    %25 = vector.broadcast %cst_18 : f32 to vector<16x16xf32>
    %26 = arith.minimumf %25, %24 : vector<16x16xf32>
    %cst_19 = arith.constant 0.166666672 : f32
    %27 = vector.broadcast %cst_19 : f32 to vector<16x16xf32>
    %28 = arith.mulf %26, %27 : vector<16x16xf32>
    %c0_20 = arith.constant 0 : index
    %c0_21 = arith.constant 0 : index
    %29 = vector.load %arg6[%c0_20, %c0_21] : memref<8x16xf32, #tpu.memory_space<vmem>>, vector<8x16xf32>
    %cst_22 = arith.constant dense<0.000000e+00> : vector<8x16xf32>
    %30 = tpu.matmul %29, %20, %cst_22 {dimension_numbers = #tpu.dot_dimension_numbers<[1], [0], [0], [1], [0, 0, 1, 1], [], []>} : vector<8x16xf32>, vector<16x16xf32>, vector<8x16xf32> -> vector<8x16xf32>
    %31 = arith.negf %30 : vector<8x16xf32>
    %32 = math.exp %31 : vector<8x16xf32>
    %cst_23 = arith.constant 1.000000e+00 : f32
    %33 = vector.broadcast %cst_23 : f32 to vector<8x16xf32>
    %34 = arith.addf %33, %32 : vector<8x16xf32>
    %35 = arith.divf %33, %34 : vector<8x16xf32>
    %c0_24 = arith.constant 0 : index
    %c0_25 = arith.constant 0 : index
    %36 = vector.load %arg7[%c0_24, %c0_25] : memref<8x16xf32, #tpu.memory_space<vmem>>, vector<8x16xf32>
    %cst_26 = arith.constant dense<0.000000e+00> : vector<8x16xf32>
    %37 = tpu.matmul %36, %28, %cst_26 {dimension_numbers = #tpu.dot_dimension_numbers<[1], [0], [0], [1], [0, 0, 1, 1], [], []>} : vector<8x16xf32>, vector<16x16xf32>, vector<8x16xf32> -> vector<8x16xf32>
    %38 = arith.negf %37 : vector<8x16xf32>
    %39 = math.exp %38 : vector<8x16xf32>
    %cst_27 = arith.constant 1.000000e+00 : f32
    %40 = vector.broadcast %cst_27 : f32 to vector<8x16xf32>
    %41 = arith.addf %40, %39 : vector<8x16xf32>
    %42 = arith.divf %40, %41 : vector<8x16xf32>
    %c0_28 = arith.constant 0 : index
    %c0_29 = arith.constant 0 : index
    %43 = vector.load %arg8[%c0_28, %c0_29] : memref<16x256xf32, #tpu.memory_space<vmem>>, vector<16x256xf32>
    %cst_30 = arith.constant dense<0.000000e+00> : vector<8x256xf32>
    %44 = tpu.matmul %35, %43, %cst_30 {dimension_numbers = #tpu.dot_dimension_numbers<[1], [0], [0], [1], [0, 0, 1, 1], [], []>} : vector<8x16xf32>, vector<16x256xf32>, vector<8x256xf32> -> vector<8x256xf32>
    %c0_31 = arith.constant 0 : index
    %c0_32 = arith.constant 0 : index
    %45 = vector.load %arg9[%c0_31, %c0_32] : memref<16x256xf32, #tpu.memory_space<vmem>>, vector<16x256xf32>
    %cst_33 = arith.constant dense<0.000000e+00> : vector<8x256xf32>
    %46 = tpu.matmul %42, %45, %cst_33 {dimension_numbers = #tpu.dot_dimension_numbers<[1], [0], [0], [1], [0, 0, 1, 1], [], []>} : vector<8x16xf32>, vector<16x256xf32>, vector<8x256xf32> -> vector<8x256xf32>
    %47 = arith.mulf %0, %44 : vector<8x256xf32>
    %48 = arith.mulf %47, %46 : vector<8x256xf32>
    %c0_34 = arith.constant 0 : index
    %c0_35 = arith.constant 0 : index
    %49 = vector.load %arg10[%c0_34, %c0_35] : memref<8x256xf32, #tpu.memory_space<vmem>>, vector<8x256xf32>
    tpu.vector_store %arg10[%c0_34, %c0_35], %48 {strides = array<i32>} : memref<8x256xf32, #tpu.memory_space<vmem>>, vector<8x256xf32>,
    return
  }
  func.func @transform_0(%arg0: i32) -> (i32, i32) {
    %c0_i32 = arith.constant 0 : i32
    %c0_i32_0 = arith.constant 0 : i32
    return %arg0, %c0_i32 : i32, i32
  }
  func.func @transform_1(%arg0: i32) -> (i32, i32) {
    %c0_i32 = arith.constant 0 : i32
    %c0_i32_0 = arith.constant 0 : i32
    %c0_i32_1 = arith.constant 0 : i32
    return %c0_i32, %c0_i32_0 : i32, i32
  }
  func.func @transform_2(%arg0: i32) -> (i32, i32) {
    %c0_i32 = arith.constant 0 : i32
    %c0_i32_0 = arith.constant 0 : i32
    %c0_i32_1 = arith.constant 0 : i32
    return %c0_i32, %c0_i32_0 : i32, i32
  }
  func.func @transform_3(%arg0: i32) -> (i32, i32) {
    %c0_i32 = arith.constant 0 : i32
    %c0_i32_0 = arith.constant 0 : i32
    %c0_i32_1 = arith.constant 0 : i32
    return %c0_i32, %c0_i32_0 : i32, i32
  }
  func.func @transform_4(%arg0: i32) -> (i32, i32) {
    %c0_i32 = arith.constant 0 : i32
    %c0_i32_0 = arith.constant 0 : i32
    %c0_i32_1 = arith.constant 0 : i32
    return %c0_i32, %c0_i32_0 : i32, i32
  }
  func.func @transform_5(%arg0: i32) -> (i32, i32) {
    %c0_i32 = arith.constant 0 : i32
    %c0_i32_0 = arith.constant 0 : i32
    %c0_i32_1 = arith.constant 0 : i32
    return %c0_i32, %c0_i32_0 : i32, i32
  }
  func.func @transform_6(%arg0: i32) -> (i32, i32) {
    %c0_i32 = arith.constant 0 : i32
    %c0_i32_0 = arith.constant 0 : i32
    %c0_i32_1 = arith.constant 0 : i32
    return %c0_i32, %c0_i32_0 : i32, i32
  }
  func.func @transform_7(%arg0: i32) -> (i32, i32) {
    %c0_i32 = arith.constant 0 : i32
    %c0_i32_0 = arith.constant 0 : i32
    %c0_i32_1 = arith.constant 0 : i32
    return %c0_i32, %c0_i32_0 : i32, i32
  }
  func.func @transform_8(%arg0: i32) -> (i32, i32) {
    %c0_i32 = arith.constant 0 : i32
    %c0_i32_0 = arith.constant 0 : i32
    %c0_i32_1 = arith.constant 0 : i32
    return %c0_i32, %c0_i32_0 : i32, i32
  }
  func.func @transform_9(%arg0: i32) -> (i32, i32) {
    %c0_i32 = arith.constant 0 : i32
    %c0_i32_0 = arith.constant 0 : i32
    return %arg0, %c0_i32 : i32, i32
  }
}

</mosaic_0001>

<llo_original>
// kernel: tpu_custom_call.1
$region0: #{tpu_custom_call.1}
  #allocation0 [shape = 'u32[]', space=smem, size = 0x4, offset = 0x4, fixed_abs, tag = 'smem constant byte address 0x4 - core index']
  #allocation1 [shape = 'u32[144,128]{1,0:T(1,128)}', space=vmem, size = 0x12000, scoped, tag = 'internal scratch']
  %s0 = inlined_call_operand.hbm [shape: f32[8,256], index: 0, kind: input, shape index: {}]
  %s1 = inlined_call_operand.hbm [shape: f32[256,16], index: 1, kind: input, shape index: {}]
  %s2 = inlined_call_operand.hbm [shape: f32[256,16], index: 2, kind: input, shape index: {}]
  %s3 = inlined_call_operand.hbm [shape: f32[16,8], index: 3, kind: input, shape index: {}]
  %s4 = inlined_call_operand.hbm [shape: f32[16,1], index: 4, kind: input, shape index: {}]
  %s5 = inlined_call_operand.hbm [shape: f32[8,16], index: 5, kind: input, shape index: {}]
  %s6 = inlined_call_operand.hbm [shape: f32[8,16], index: 6, kind: input, shape index: {}]
  %s7 = inlined_call_operand.hbm [shape: f32[16,256], index: 7, kind: input, shape index: {}]
  %s8 = inlined_call_operand.hbm [shape: f32[16,256], index: 8, kind: input, shape index: {}]
  %s9 = inlined_call_operand.hbm [shape: f32[8,256], index: 9, kind: output, shape index: {}]
  %s10 = sld [smem:[#allocation0]]
  $region82: #{tpu_custom_call.1} parent=0
    _
  %s12 = ssub.s32 1, %s10
  %s13 = scalar_select 0, %s12, %s10
  $region1: #{tpu_custom_call.1} parent=0
    #allocation2 [shape = 'u8[8192]{0}', space=vmem, size = 0x2000, scoped, tag = 'input window, operand 0, single buffered']
    #allocation3 [shape = 's32[1]{0}', space=sflag, size = 0x4, scoped, tag = 'scoped memory for tpu_custom_call.1']
    #allocation4 [shape = 's32[1]{0}', space=sflag, size = 0x4, scoped, tag = 'scoped memory for tpu_custom_call.1']
    #allocation5 [shape = 'u8[131072]{0}', space=vmem, size = 0x20000, scoped, tag = 'input window, operand 1, single buffered']
    #allocation6 [shape = 's32[1]{0}', space=sflag, size = 0x4, scoped, tag = 'scoped memory for tpu_custom_call.1']
    #allocation7 [shape = 'u8[131072]{0}', space=vmem, size = 0x20000, scoped, tag = 'input window, operand 2, single buffered']
    #allocation8 [shape = 'u8[8192]{0}', space=vmem, size = 0x2000, scoped, tag = 'input window, operand 3, single buffered']
    #allocation9 [shape = 's32[1]{0}', space=sflag, size = 0x4, scoped, tag = 'scoped memory for tpu_custom_call.1']
    #allocation10 [shape = 'u8[8192]{0}', space=vmem, size = 0x2000, scoped, tag = 'input window, operand 4, single buffered']
    #allocation11 [shape = 'u8[4096]{0}', space=vmem, size = 0x1000, scoped, tag = 'input window, operand 5, single buffered']
    #allocation12 [shape = 's32[1]{0}', space=sflag, size = 0x4, scoped, tag = 'scoped memory for tpu_custom_call.1']
    #allocation13 [shape = 'u8[4096]{0}', space=vmem, size = 0x1000, scoped, tag = 'input window, operand 6, single buffered']
    #allocation14 [shape = 'u8[16384]{0}', space=vmem, size = 0x4000, scoped, tag = 'input window, operand 7, single buffered']
    #allocation15 [shape = 's32[1]{0}', space=sflag, size = 0x4, scoped, tag = 'scoped memory for tpu_custom_call.1']
    #allocation16 [shape = 'u8[16384]{0}', space=vmem, size = 0x4000, scoped, tag = 'input window, operand 8, single buffered']
    #allocation17 [shape = 'u8[8192]{0}', space=vmem, size = 0x2000, scoped, tag = 'output window, operand 0, single buffered']
    %14 = vsyncpa [#allocation3], 0
    %15 = vsyncpa [#allocation6], 0
    %16 = vsyncpa [#allocation9], 0
    %17 = vsyncpa [#allocation12], 0
    %18 = vsyncpa [#allocation15], 0
    %19 = vsyncpa [#allocation4], 0
    // Predicated region
    $region2: #{tpu_custom_call.1} parent=1 // pred_check
      _
    $region3: #{tpu_custom_call.1} parent=1 // pred_check_branch
      %21 = sbr.rel (0) target = $region5
    $region4: #{tpu_custom_call.1} parent=1 // pred_region
      %s23 = ssub.s32 256, 256
      %24 = vsyncadd [#allocation3], %s23
      %s26 = sshll.u32 [#allocation2], 4
      %s27 = int_to_ptr.vmem [resolvable:$true] %s26
      %29 = dma.hbm_to_vmem [thread:$0]  %s0, 256, %s27, [#allocation3]
    $region5: #{tpu_custom_call.1} parent=1 // pred_fallthru
      _
    // Predicated region
    $region6: #{tpu_custom_call.1} parent=1 // pred_check
      _
    $region7: #{tpu_custom_call.1} parent=1 // pred_check_branch
      %31 = sbr.rel (0) target = $region9
    $region8: #{tpu_custom_call.1} parent=1 // pred_region
      %s33 = ssub.s32 4096, 4096
      %34 = vsyncadd [#allocation6], %s33
      %s35 = sshll.u32 [#allocation5], 4
      %s36 = int_to_ptr.vmem [resolvable:$true] %s35
      %41 = dma.hbm_to_vmem [thread:$0]  %s1, 4096, %s36, [#allocation6], 128, 128, 8
    $region9: #{tpu_custom_call.1} parent=1 // pred_fallthru
      _
    // Predicated region
    $region10: #{tpu_custom_call.1} parent=1 // pred_check
      _
    $region11: #{tpu_custom_call.1} parent=1 // pred_check_branch
      %43 = sbr.rel (0) target = $region13
    $region12: #{tpu_custom_call.1} parent=1 // pred_region
      %s45 = ssub.s32 4096, 4096
      %46 = vsyncadd [#allocation6], %s45
      %s47 = sshll.u32 [#allocation7], 4
      %s48 = int_to_ptr.vmem [resolvable:$true] %s47
      %53 = dma.hbm_to_vmem [thread:$0]  %s2, 4096, %s48, [#allocation6], 128, 128, 8
    $region13: #{tpu_custom_call.1} parent=1 // pred_fallthru
      _
    // Predicated region
    $region14: #{tpu_custom_call.1} parent=1 // pred_check
      _
    $region15: #{tpu_custom_call.1} parent=1 // pred_check_branch
      %55 = sbr.rel (0) target = $region17
    $region16: #{tpu_custom_call.1} parent=1 // pred_region
      %s57 = ssub.s32 256, 256
      %58 = vsyncadd [#allocation9], %s57
      %s59 = sshll.u32 [#allocation8], 4
      %s60 = int_to_ptr.vmem [resolvable:$true] %s59
      %65 = dma.hbm_to_vmem [thread:$0]  %s3, 256, %s60, [#allocation9], 128, 128, 8
    $region17: #{tpu_custom_call.1} parent=1 // pred_fallthru
      _
    // Predicated region
    $region18: #{tpu_custom_call.1} parent=1 // pred_check
      _
    $region19: #{tpu_custom_call.1} parent=1 // pred_check_branch
      %67 = sbr.rel (0) target = $region21
    $region20: #{tpu_custom_call.1} parent=1 // pred_region
      %s69 = ssub.s32 256, 256
      %70 = vsyncadd [#allocation9], %s69
      %s71 = sshll.u32 [#allocation10], 4
      %s72 = int_to_ptr.vmem [resolvable:$true] %s71
      %77 = dma.hbm_to_vmem [thread:$0]  %s4, 256, %s72, [#allocation9], 128, 128, 8
    $region21: #{tpu_custom_call.1} parent=1 // pred_fallthru
      _
    // Predicated region
    $region22: #{tpu_custom_call.1} parent=1 // pred_check
      _
    $region23: #{tpu_custom_call.1} parent=1 // pred_check_branch
      %79 = sbr.rel (0) target = $region25
    $region24: #{tpu_custom_call.1} parent=1 // pred_region
      %s81 = ssub.s32 128, 128
      %82 = vsyncadd [#allocation12], %s81
      %s84 = sshll.u32 [#allocation11], 4
      %s85 = int_to_ptr.vmem [resolvable:$true] %s84
      %87 = dma.hbm_to_vmem [thread:$0]  %s5, 128, %s85, [#allocation12]
    $region25: #{tpu_custom_call.1} parent=1 // pred_fallthru
      _
    // Predicated region
    $region26: #{tpu_custom_call.1} parent=1 // pred_check
      _
    $region27: #{tpu_custom_call.1} parent=1 // pred_check_branch
      %89 = sbr.rel (0) target = $region29
    $region28: #{tpu_custom_call.1} parent=1 // pred_region
      %s91 = ssub.s32 128, 128
      %92 = vsyncadd [#allocation12], %s91
      %s94 = sshll.u32 [#allocation13], 4
      %s95 = int_to_ptr.vmem [resolvable:$true] %s94
      %97 = dma.hbm_to_vmem [thread:$0]  %s6, 128, %s95, [#allocation12]
    $region29: #{tpu_custom_call.1} parent=1 // pred_fallthru
      _
    // Predicated region
    $region30: #{tpu_custom_call.1} parent=1 // pred_check
      _
    $region31: #{tpu_custom_call.1} parent=1 // pred_check_branch
      %99 = sbr.rel (0) target = $region33
    $region32: #{tpu_custom_call.1} parent=1 // pred_region
      %s101 = ssub.s32 512, 512
      %102 = vsyncadd [#allocation15], %s101
      %s103 = sshll.u32 [#allocation14], 4
      %s104 = int_to_ptr.vmem [resolvable:$true] %s103
      %109 = dma.hbm_to_vmem [thread:$0]  %s7, 512, %s104, [#allocation15], 256, 256, 16
    $region33: #{tpu_custom_call.1} parent=1 // pred_fallthru
      _
    // Predicated region
    $region34: #{tpu_custom_call.1} parent=1 // pred_check
      _
    $region35: #{tpu_custom_call.1} parent=1 // pred_check_branch
      %111 = sbr.rel (0) target = $region37
    $region36: #{tpu_custom_call.1} parent=1 // pred_region
      %s113 = ssub.s32 512, 512
      %114 = vsyncadd [#allocation15], %s113
      %s115 = sshll.u32 [#allocation16], 4
      %s116 = int_to_ptr.vmem [resolvable:$true] %s115
      %121 = dma.hbm_to_vmem [thread:$0]  %s8, 512, %s116, [#allocation15], 256, 256, 16
    $region37: #{tpu_custom_call.1} parent=1 // pred_fallthru
      _
    // Predicated region
    $region38: #{tpu_custom_call.1} parent=1 // pred_check
      _
    $region39: #{tpu_custom_call.1} parent=1 // pred_check_branch
      %123 = sbr.rel (0) target = $region41
    $region40: #{tpu_custom_call.1} parent=1 // pred_region
      %124 = dma.done [#allocation3], 256
    $region41: #{tpu_custom_call.1} parent=1 // pred_fallthru
      _
    // Predicated region
    $region42: #{tpu_custom_call.1} parent=1 // pred_check
      _
    $region43: #{tpu_custom_call.1} parent=1 // pred_check_branch
      %126 = sbr.rel (0) target = $region45
    $region44: #{tpu_custom_call.1} parent=1 // pred_region
      %127 = dma.done [#allocation6], 4096
    $region45: #{tpu_custom_call.1} parent=1 // pred_fallthru
      _
    // Predicated region
    $region46: #{tpu_custom_call.1} parent=1 // pred_check
      _
    $region47: #{tpu_custom_call.1} parent=1 // pred_check_branch
      %129 = sbr.rel (0) target = $region49
    $region48: #{tpu_custom_call.1} parent=1 // pred_region
      %130 = dma.done [#allocation6], 4096
    $region49: #{tpu_custom_call.1} parent=1 // pred_fallthru
      _
    // Predicated region
    $region50: #{tpu_custom_call.1} parent=1 // pred_check
      _
    $region51: #{tpu_custom_call.1} parent=1 // pred_check_branch
      %132 = sbr.rel (0) target = $region53
    $region52: #{tpu_custom_call.1} parent=1 // pred_region
      %133 = dma.done [#allocation9], 256
    $region53: #{tpu_custom_call.1} parent=1 // pred_fallthru
      _
    // Predicated region
    $region54: #{tpu_custom_call.1} parent=1 // pred_check
      _
    $region55: #{tpu_custom_call.1} parent=1 // pred_check_branch
      %135 = sbr.rel (0) target = $region57
    $region56: #{tpu_custom_call.1} parent=1 // pred_region
      %136 = dma.done [#allocation9], 256
    $region57: #{tpu_custom_call.1} parent=1 // pred_fallthru
      _
    // Predicated region
    $region58: #{tpu_custom_call.1} parent=1 // pred_check
      _
    $region59: #{tpu_custom_call.1} parent=1 // pred_check_branch
      %138 = sbr.rel (0) target = $region61
    $region60: #{tpu_custom_call.1} parent=1 // pred_region
      %139 = dma.done [#allocation12], 128
    $region61: #{tpu_custom_call.1} parent=1 // pred_fallthru
      _
    // Predicated region
    $region62: #{tpu_custom_call.1} parent=1 // pred_check
      _
    $region63: #{tpu_custom_call.1} parent=1 // pred_check_branch
      %141 = sbr.rel (0) target = $region65
    $region64: #{tpu_custom_call.1} parent=1 // pred_region
      %142 = dma.done [#allocation12], 128
    $region65: #{tpu_custom_call.1} parent=1 // pred_fallthru
      _
    // Predicated region
    $region66: #{tpu_custom_call.1} parent=1 // pred_check
      _
    $region67: #{tpu_custom_call.1} parent=1 // pred_check_branch
      %144 = sbr.rel (0) target = $region69
    $region68: #{tpu_custom_call.1} parent=1 // pred_region
      %145 = dma.done [#allocation15], 512
    $region69: #{tpu_custom_call.1} parent=1 // pred_fallthru
      _
    // Predicated region
    $region70: #{tpu_custom_call.1} parent=1 // pred_check
      _
    $region71: #{tpu_custom_call.1} parent=1 // pred_check_branch
      %147 = sbr.rel (0) target = $region73
    $region72: #{tpu_custom_call.1} parent=1 // pred_region
      %148 = dma.done [#allocation15], 512
    $region73: #{tpu_custom_call.1} parent=1 // pred_fallthru
      _
    %v149 = vld [vmem:[#allocation2] sm:$0xff]
    %v150 = vld [vmem:[#allocation2 + $0x8] sm:$0xff]
    %v151 = vld [vmem:[#allocation5] sm:$0xff]
    %v152 = vld [vmem:[#allocation5 + $0x8] sm:$0xff]
    %v153 = vld [vmem:[#allocation5 + $0x10] sm:$0xff]
    %v154 = vld [vmem:[#allocation5 + $0x18] sm:$0xff]
    %v155 = vld [vmem:[#allocation5 + $0x20] sm:$0xff]
    %v156 = vld [vmem:[#allocation5 + $0x28] sm:$0xff]
    %v157 = vld [vmem:[#allocation5 + $0x30] sm:$0xff]
    %v158 = vld [vmem:[#allocation5 + $0x38] sm:$0xff]
    %v159 = vld [vmem:[#allocation5 + $0x40] sm:$0xff]
    %v160 = vld [vmem:[#allocation5 + $0x48] sm:$0xff]
    %v161 = vld [vmem:[#allocation5 + $0x50] sm:$0xff]
    %v162 = vld [vmem:[#allocation5 + $0x58] sm:$0xff]
    %v163 = vld [vmem:[#allocation5 + $0x60] sm:$0xff]
    %v164 = vld [vmem:[#allocation5 + $0x68] sm:$0xff]
    %v165 = vld [vmem:[#allocation5 + $0x70] sm:$0xff]
    %v166 = vld [vmem:[#allocation5 + $0x78] sm:$0xff]
    %v167 = vld [vmem:[#allocation5 + $0x80] sm:$0xff]
    %v168 = vld [vmem:[#allocation5 + $0x88] sm:$0xff]
    %v169 = vld [vmem:[#allocation5 + $0x90] sm:$0xff]
    %v170 = vld [vmem:[#allocation5 + $0x98] sm:$0xff]
    %v171 = vld [vmem:[#allocation5 + $0xa0] sm:$0xff]
    %v172 = vld [vmem:[#allocation5 + $0xa8] sm:$0xff]
    %v173 = vld [vmem:[#allocation5 + $0xb0] sm:$0xff]
    %v174 = vld [vmem:[#allocation5 + $0xb8] sm:$0xff]
    %v175 = vld [vmem:[#allocation5 + $0xc0] sm:$0xff]
    %v176 = vld [vmem:[#allocation5 + $0xc8] sm:$0xff]
    %v177 = vld [vmem:[#allocation5 + $0xd0] sm:$0xff]
    %v178 = vld [vmem:[#allocation5 + $0xd8] sm:$0xff]
    %v179 = vld [vmem:[#allocation5 + $0xe0] sm:$0xff]
    %v180 = vld [vmem:[#allocation5 + $0xe8] sm:$0xff]
    %v181 = vld [vmem:[#allocation5 + $0xf0] sm:$0xff]
    %v182 = vld [vmem:[#allocation5 + $0xf8] sm:$0xff]
    %183 = vmatprep.subr.mxu0 0.0
    %184 = vmatpush1.msra.mxu0 %v151
    %185 = vmatprep.subr.mxu0 0.0
    %186 = vmatpush1.msra.mxu0 %v152
    %187 = vmatprep.subr.mxu0 0.0
    %188 = vmatpush1.msra.mxu0 %v153
    %189 = vmatprep.subr.mxu0 0.0
    %190 = vmatpush1.msra.mxu0 %v154
    %191 = vmatprep.subr.mxu0 0.0
    %192 = vmatpush1.msra.mxu0 %v155
    %193 = vmatprep.subr.mxu0 0.0
    %194 = vmatpush1.msra.mxu0 %v156
    %195 = vmatprep.subr.mxu0 0.0
    %196 = vmatpush1.msra.mxu0 %v157
    %197 = vmatprep.subr.mxu0 0.0
    %198 = vmatpush1.msra.mxu0 %v158
    %199 = vmatprep.subr.mxu0 0.0
    %200 = vmatpush1.msra.mxu0 %v159
    %201 = vmatprep.subr.mxu0 0.0
    %202 = vmatpush1.msra.mxu0 %v160
    %203 = vmatprep.subr.mxu0 0.0
    %204 = vmatpush1.msra.mxu0 %v161
    %205 = vmatprep.subr.mxu0 0.0
    %206 = vmatpush1.msra.mxu0 %v162
    %207 = vmatprep.subr.mxu0 0.0
    %208 = vmatpush1.msra.mxu0 %v163
    %209 = vmatprep.subr.mxu0 0.0
    %210 = vmatpush1.msra.mxu0 %v164
    %211 = vmatprep.subr.mxu0 0.0
    %212 = vmatpush1.msra.mxu0 %v165
    %213 = vmatprep.subr.mxu0 0.0
    %214 = vmatpush1.msra.mxu0 %v166
    %215 = vmatprep.subr.mxu0 0.0
    %216 = vmatpush1.msra.mxu0 %v167
    %217 = vmatprep.subr.mxu0 0.0
    %218 = vmatpush1.msra.mxu0 %v168
    %219 = vmatprep.subr.mxu0 0.0
    %220 = vmatpush1.msra.mxu0 %v169
    %221 = vmatprep.subr.mxu0 0.0
    %222 = vmatpush1.msra.mxu0 %v170
    %223 = vmatprep.subr.mxu0 0.0
    %224 = vmatpush1.msra.mxu0 %v171
    %225 = vmatprep.subr.mxu0 0.0
    %226 = vmatpush1.msra.mxu0 %v172
    %227 = vmatprep.subr.mxu0 0.0
    %228 = vmatpush1.msra.mxu0 %v173
    %229 = vmatprep.subr.mxu0 0.0
    %230 = vmatpush1.msra.mxu0 %v174
    %231 = vmatprep.subr.mxu0 0.0
    %232 = vmatpush1.msra.mxu0 %v175
    %233 = vmatprep.subr.mxu0 0.0
    %234 = vmatpush1.msra.mxu0 %v176
    %235 = vmatprep.subr.mxu0 0.0
    %236 = vmatpush1.msra.mxu0 %v177
    %237 = vmatprep.subr.mxu0 0.0
    %238 = vmatpush1.msra.mxu0 %v178
    %239 = vmatprep.subr.mxu0 0.0
    %240 = vmatpush1.msra.mxu0 %v179
    %241 = vmatprep.subr.mxu0 0.0
    %242 = vmatpush1.msra.mxu0 %v180
    %243 = vmatprep.subr.mxu0 0.0
    %244 = vmatpush1.msra.mxu0 %v181
    %245 = vmatprep.subr.mxu0 0.0
    %246 = vmatpush1.msra.mxu0 %v182
    %247 = vmatprep.mubr.f32.mxu0 %v150
    %248 = vmatmul.mubr.f32.gmra.mrb[0].mxu0 %v149
    %v249 = vpop.f32.mrb[0].mxu0
    %v250 = vadd.f32 0.0, %v249
    %v251 = vpop.f32.mrb[0].mxu0
    %252 = vdwg.mxu0
    %v253 = vld [vmem:[#allocation7] sm:$0xff]
    %v254 = vld [vmem:[#allocation7 + $0x8] sm:$0xff]
    %v255 = vld [vmem:[#allocation7 + $0x10] sm:$0xff]
    %v256 = vld [vmem:[#allocation7 + $0x18] sm:$0xff]
    %v257 = vld [vmem:[#allocation7 + $0x20] sm:$0xff]
    %v258 = vld [vmem:[#allocation7 + $0x28] sm:$0xff]
    %v259 = vld [vmem:[#allocation7 + $0x30] sm:$0xff]
    %v260 = vld [vmem:[#allocation7 + $0x38] sm:$0xff]
    %v261 = vld [vmem:[#allocation7 + $0x40] sm:$0xff]
    %v262 = vld [vmem:[#allocation7 + $0x48] sm:$0xff]
    %v263 = vld [vmem:[#allocation7 + $0x50] sm:$0xff]
    %v264 = vld [vmem:[#allocation7 + $0x58] sm:$0xff]
    %v265 = vld [vmem:[#allocation7 + $0x60] sm:$0xff]
    %v266 = vld [vmem:[#allocation7 + $0x68] sm:$0xff]
    %v267 = vld [vmem:[#allocation7 + $0x70] sm:$0xff]
    %v268 = vld [vmem:[#allocation7 + $0x78] sm:$0xff]
    %v269 = vld [vmem:[#allocation7 + $0x80] sm:$0xff]
    %v270 = vld [vmem:[#allocation7 + $0x88] sm:$0xff]
    %v271 = vld [vmem:[#allocation7 + $0x90] sm:$0xff]
    %v272 = vld [vmem:[#allocation7 + $0x98] sm:$0xff]
    %v273 = vld [vmem:[#allocation7 + $0xa0] sm:$0xff]
    %v274 = vld [vmem:[#allocation7 + $0xa8] sm:$0xff]
    %v275 = vld [vmem:[#allocation7 + $0xb0] sm:$0xff]
    %v276 = vld [vmem:[#allocation7 + $0xb8] sm:$0xff]
    %v277 = vld [vmem:[#allocation7 + $0xc0] sm:$0xff]
    %v278 = vld [vmem:[#allocation7 + $0xc8] sm:$0xff]
    %v279 = vld [vmem:[#allocation7 + $0xd0] sm:$0xff]
    %v280 = vld [vmem:[#allocation7 + $0xd8] sm:$0xff]
    %v281 = vld [vmem:[#allocation7 + $0xe0] sm:$0xff]
    %v282 = vld [vmem:[#allocation7 + $0xe8] sm:$0xff]
    %v283 = vld [vmem:[#allocation7 + $0xf0] sm:$0xff]
    %v284 = vld [vmem:[#allocation7 + $0xf8] sm:$0xff]
    %285 = vmatprep.subr.mxu0 0.0
    %286 = vmatpush1.msra.mxu0 %v253
    %287 = vmatprep.subr.mxu0 0.0
    %288 = vmatpush1.msra.mxu0 %v254
    %289 = vmatprep.subr.mxu0 0.0
    %290 = vmatpush1.msra.mxu0 %v255
    %291 = vmatprep.subr.mxu0 0.0
    %292 = vmatpush1.msra.mxu0 %v256
    %293 = vmatprep.subr.mxu0 0.0
    %294 = vmatpush1.msra.mxu0 %v257
    %295 = vmatprep.subr.mxu0 0.0
    %296 = vmatpush1.msra.mxu0 %v258
    %297 = vmatprep.subr.mxu0 0.0
    %298 = vmatpush1.msra.mxu0 %v259
    %299 = vmatprep.subr.mxu0 0.0
    %300 = vmatpush1.msra.mxu0 %v260
    %301 = vmatprep.subr.mxu0 0.0
    %302 = vmatpush1.msra.mxu0 %v261
    %303 = vmatprep.subr.mxu0 0.0
    %304 = vmatpush1.msra.mxu0 %v262
    %305 = vmatprep.subr.mxu0 0.0
    %306 = vmatpush1.msra.mxu0 %v263
    %307 = vmatprep.subr.mxu0 0.0
    %308 = vmatpush1.msra.mxu0 %v264
    %309 = vmatprep.subr.mxu0 0.0
    %310 = vmatpush1.msra.mxu0 %v265
    %311 = vmatprep.subr.mxu0 0.0
    %312 = vmatpush1.msra.mxu0 %v266
    %313 = vmatprep.subr.mxu0 0.0
    %314 = vmatpush1.msra.mxu0 %v267
    %315 = vmatprep.subr.mxu0 0.0
    %316 = vmatpush1.msra.mxu0 %v268
    %317 = vmatprep.subr.mxu0 0.0
    %318 = vmatpush1.msra.mxu0 %v269
    %319 = vmatprep.subr.mxu0 0.0
    %320 = vmatpush1.msra.mxu0 %v270
    %321 = vmatprep.subr.mxu0 0.0
    %322 = vmatpush1.msra.mxu0 %v271
    %323 = vmatprep.subr.mxu0 0.0
    %324 = vmatpush1.msra.mxu0 %v272
    %325 = vmatprep.subr.mxu0 0.0
    %326 = vmatpush1.msra.mxu0 %v273
    %327 = vmatprep.subr.mxu0 0.0
    %328 = vmatpush1.msra.mxu0 %v274
    %329 = vmatprep.subr.mxu0 0.0
    %330 = vmatpush1.msra.mxu0 %v275
    %331 = vmatprep.subr.mxu0 0.0
    %332 = vmatpush1.msra.mxu0 %v276
    %333 = vmatprep.subr.mxu0 0.0
    %334 = vmatpush1.msra.mxu0 %v277
    %335 = vmatprep.subr.mxu0 0.0
    %336 = vmatpush1.msra.mxu0 %v278
    %337 = vmatprep.subr.mxu0 0.0
    %338 = vmatpush1.msra.mxu0 %v279
    %339 = vmatprep.subr.mxu0 0.0
    %340 = vmatpush1.msra.mxu0 %v280
    %341 = vmatprep.subr.mxu0 0.0
    %342 = vmatpush1.msra.mxu0 %v281
    %343 = vmatprep.subr.mxu0 0.0
    %344 = vmatpush1.msra.mxu0 %v282
    %345 = vmatprep.subr.mxu0 0.0
    %346 = vmatpush1.msra.mxu0 %v283
    %347 = vmatprep.subr.mxu0 0.0
    %348 = vmatpush1.msra.mxu0 %v284
    %349 = vmatprep.mubr.f32.mxu0 %v150
    %350 = vmatmul.mubr.f32.gmra.mrb[0].mxu0 %v149
    %v351 = vpop.f32.mrb[0].mxu0
    %v352 = vadd.f32 0.0, %v351
    %v353 = vpop.f32.mrb[0].mxu0
    %354 = vdwg.mxu0
    %v355 = vld [vmem:[#allocation8] sm:$0xff]
    %v356 = vld [vmem:[#allocation8 + $0x8] sm:$0xff]
    %v357 = vld [vmem:[#allocation10] sm:$0xff]
    %v358 = vld [vmem:[#allocation10 + $0x8] sm:$0xff]
    %360 = vset.pattern.permute.xlu0 0
    %361 = vperm.xlu0 %360, %v357
    %v362 = vpop.permute.xlu0 %361
    %365 = vset.pattern.permute.xlu0 0
    %366 = vperm.xlu0 %365, %v358
    %v367 = vpop.permute.xlu0 %366
    %vm369 = vcmask 64512
    %v371 = vsel %vm369, %v355, 0
    %v374 = vsel %vm369, %v356, 0
    %376 = vmatprep.subr.mxu0 0.0
    %377 = vmatpush1.msra.mxu0 %v250
    %378 = vmatprep.subr.mxu0 0.0
    %379 = vmatpush1.msra.mxu0 0.0
    %380 = vmatprep.subr.mxu0 0.0
    %381 = vmatpush1.msra.mxu0 0.0
    %382 = vmatprep.subr.mxu0 0.0
    %383 = vmatpush1.msra.mxu0 0.0
    %384 = vmatprep.subr.mxu0 0.0
    %385 = vmatpush1.msra.mxu0 0.0
    %386 = vmatprep.subr.mxu0 0.0
    %387 = vmatpush1.msra.mxu0 0.0
    %388 = vmatprep.subr.mxu0 0.0
    %389 = vmatpush1.msra.mxu0 0.0
    %390 = vmatprep.subr.mxu0 0.0
    %391 = vmatpush1.msra.mxu0 0.0
    %392 = vmatprep.subr.mxu0 0.0
    %393 = vmatpush1.msra.mxu0 0.0
    %394 = vmatprep.subr.mxu0 0.0
    %395 = vmatpush1.msra.mxu0 0.0
    %396 = vmatprep.subr.mxu0 0.0
    %397 = vmatpush1.msra.mxu0 0.0
    %398 = vmatprep.subr.mxu0 0.0
    %399 = vmatpush1.msra.mxu0 0.0
    %400 = vmatprep.subr.mxu0 0.0
    %401 = vmatpush1.msra.mxu0 0.0
    %402 = vmatprep.subr.mxu0 0.0
    %403 = vmatpush1.msra.mxu0 0.0
    %404 = vmatprep.subr.mxu0 0.0
    %405 = vmatpush1.msra.mxu0 0.0
    %406 = vmatprep.subr.mxu0 0.0
    %407 = vmatpush1.msra.mxu0 0.0
    %408 = vmatprep.subr.mxu0 0.0
    %409 = vmatpush1.msra.mxu0 0.0
    %410 = vmatprep.subr.mxu0 0.0
    %411 = vmatpush1.msra.mxu0 0.0
    %412 = vmatprep.subr.mxu0 0.0
    %413 = vmatpush1.msra.mxu0 0.0
    %414 = vmatprep.subr.mxu0 0.0
    %415 = vmatpush1.msra.mxu0 0.0
    %416 = vmatprep.subr.mxu0 0.0
    %417 = vmatpush1.msra.mxu0 0.0
    %418 = vmatprep.subr.mxu0 0.0
    %419 = vmatpush1.msra.mxu0 0.0
    %420 = vmatprep.subr.mxu0 0.0
    %421 = vmatpush1.msra.mxu0 0.0
    %422 = vmatprep.subr.mxu0 0.0
    %423 = vmatpush1.msra.mxu0 0.0
    %424 = vmatprep.subr.mxu0 0.0
    %425 = vmatpush1.msra.mxu0 0.0
    %426 = vmatprep.subr.mxu0 0.0
    %427 = vmatpush1.msra.mxu0 0.0
    %428 = vmatprep.subr.mxu0 0.0
    %429 = vmatpush1.msra.mxu0 0.0
    %430 = vmatprep.subr.mxu0 0.0
    %431 = vmatpush1.msra.mxu0 0.0
    %432 = vmatprep.subr.mxu0 0.0
    %433 = vmatpush1.msra.mxu0 0.0
    %434 = vmatprep.subr.mxu0 0.0
    %435 = vmatpush1.msra.mxu0 0.0
    %436 = vmatprep.subr.mxu0 0.0
    %437 = vmatpush1.msra.mxu0 0.0
    %438 = vmatprep.subr.mxu0 0.0
    %439 = vmatpush1.msra.mxu0 0.0
    %440 = vmatprep.mubr.f32.mxu0 0.0
    %441 = vmatmul.mubr.f32.gmra.mrb[0].mxu0 %v371
    %v442 = vpop.f32.mrb[0].mxu0
    %v443 = vadd.f32 %v362, %v442
    %v444 = vpop.f32.mrb[0].mxu0
    %445 = vmatprep.mubr.f32.mxu0 0.0
    %446 = vmatmul.mubr.f32.gmra.mrb[0].mxu0 %v374
    %v447 = vpop.f32.mrb[0].mxu0
    %v448 = vadd.f32 %v367, %v447
    %v449 = vpop.f32.mrb[0].mxu0
    %450 = vdwg.mxu0
    %451 = vmatprep.subr.mxu0 0.0
    %452 = vmatpush1.msra.mxu0 %v352
    %453 = vmatprep.subr.mxu0 0.0
    %454 = vmatpush1.msra.mxu0 0.0
    %455 = vmatprep.subr.mxu0 0.0
    %456 = vmatpush1.msra.mxu0 0.0
    %457 = vmatprep.subr.mxu0 0.0
    %458 = vmatpush1.msra.mxu0 0.0
    %459 = vmatprep.subr.mxu0 0.0
    %460 = vmatpush1.msra.mxu0 0.0
    %461 = vmatprep.subr.mxu0 0.0
    %462 = vmatpush1.msra.mxu0 0.0
    %463 = vmatprep.subr.mxu0 0.0
    %464 = vmatpush1.msra.mxu0 0.0
    %465 = vmatprep.subr.mxu0 0.0
    %466 = vmatpush1.msra.mxu0 0.0
    %467 = vmatprep.subr.mxu0 0.0
    %468 = vmatpush1.msra.mxu0 0.0
    %469 = vmatprep.subr.mxu0 0.0
    %470 = vmatpush1.msra.mxu0 0.0
    %471 = vmatprep.subr.mxu0 0.0
    %472 = vmatpush1.msra.mxu0 0.0
    %473 = vmatprep.subr.mxu0 0.0
    %474 = vmatpush1.msra.mxu0 0.0
    %475 = vmatprep.subr.mxu0 0.0
    %476 = vmatpush1.msra.mxu0 0.0
    %477 = vmatprep.subr.mxu0 0.0
    %478 = vmatpush1.msra.mxu0 0.0
    %479 = vmatprep.subr.mxu0 0.0
    %480 = vmatpush1.msra.mxu0 0.0
    %481 = vmatprep.subr.mxu0 0.0
    %482 = vmatpush1.msra.mxu0 0.0
    %483 = vmatprep.subr.mxu0 0.0
    %484 = vmatpush1.msra.mxu0 0.0
    %485 = vmatprep.subr.mxu0 0.0
    %486 = vmatpush1.msra.mxu0 0.0
    %487 = vmatprep.subr.mxu0 0.0
    %488 = vmatpush1.msra.mxu0 0.0
    %489 = vmatprep.subr.mxu0 0.0
    %490 = vmatpush1.msra.mxu0 0.0
    %491 = vmatprep.subr.mxu0 0.0
    %492 = vmatpush1.msra.mxu0 0.0
    %493 = vmatprep.subr.mxu0 0.0
    %494 = vmatpush1.msra.mxu0 0.0
    %495 = vmatprep.subr.mxu0 0.0
    %496 = vmatpush1.msra.mxu0 0.0
    %497 = vmatprep.subr.mxu0 0.0
    %498 = vmatpush1.msra.mxu0 0.0
    %499 = vmatprep.subr.mxu0 0.0
    %500 = vmatpush1.msra.mxu0 0.0
    %501 = vmatprep.subr.mxu0 0.0
    %502 = vmatpush1.msra.mxu0 0.0
    %503 = vmatprep.subr.mxu0 0.0
    %504 = vmatpush1.msra.mxu0 0.0
    %505 = vmatprep.subr.mxu0 0.0
    %506 = vmatpush1.msra.mxu0 0.0
    %507 = vmatprep.subr.mxu0 0.0
    %508 = vmatpush1.msra.mxu0 0.0
    %509 = vmatprep.subr.mxu0 0.0
    %510 = vmatpush1.msra.mxu0 0.0
    %511 = vmatprep.subr.mxu0 0.0
    %512 = vmatpush1.msra.mxu0 0.0
    %513 = vmatprep.subr.mxu0 0.0
    %514 = vmatpush1.msra.mxu0 0.0
    %515 = vmatprep.mubr.f32.mxu0 0.0
    %516 = vmatmul.mubr.f32.gmra.mrb[0].mxu0 %v371
    %v517 = vpop.f32.mrb[0].mxu0
    %v518 = vadd.f32 %v362, %v517
    %v519 = vpop.f32.mrb[0].mxu0
    %520 = vmatprep.mubr.f32.mxu0 0.0
    %521 = vmatmul.mubr.f32.gmra.mrb[0].mxu0 %v374
    %v522 = vpop.f32.mrb[0].mxu0
    %v523 = vadd.f32 %v367, %v522
    %v524 = vpop.f32.mrb[0].mxu0
    %525 = vdwg.mxu0
    %v526 = vadd.f32 %v443, 3.0
    %v527 = vadd.f32 %v448, 3.0
    %v528 = vmax.f32 %v526, 0.0
    %v529 = vmax.f32 %v527, 0.0
    %v530 = vmin.f32 %v528, 6.0
    %v531 = vmin.f32 %v529, 6.0
    %v532 = vmul.f32 %v530, 0.16666667
    %v533 = vmul.f32 %v531, 0.16666667
    %v534 = vadd.f32 %v518, 3.0
    %v535 = vadd.f32 %v523, 3.0
    %v536 = vmax.f32 %v534, 0.0
    %v537 = vmax.f32 %v535, 0.0
    %v538 = vmin.f32 %v536, 6.0
    %v539 = vmin.f32 %v537, 6.0
    %v540 = vmul.f32 %v538, 0.16666667
    %v541 = vmul.f32 %v539, 0.16666667
    %v542 = vld [vmem:[#allocation11] sm:$0xff]
    %vm543 = vcmask 130048
    %v545 = vsel %vm543, %v542, 0
    %547 = vmatprep.subr.mxu0 0.0
    %548 = vmatpush1.msra.mxu0 %v532
    %549 = vmatprep.subr.mxu0 0.0
    %550 = vmatpush1.msra.mxu0 %v533
    %551 = vmatprep.subr.mxu0 0.0
    %552 = vmatpush1.msra.mxu0 0.0
    %553 = vmatprep.subr.mxu0 0.0
    %554 = vmatpush1.msra.mxu0 0.0
    %555 = vmatprep.subr.mxu0 0.0
    %556 = vmatpush1.msra.mxu0 0.0
    %557 = vmatprep.subr.mxu0 0.0
    %558 = vmatpush1.msra.mxu0 0.0
    %559 = vmatprep.subr.mxu0 0.0
    %560 = vmatpush1.msra.mxu0 0.0
    %561 = vmatprep.subr.mxu0 0.0
    %562 = vmatpush1.msra.mxu0 0.0
    %563 = vmatprep.subr.mxu0 0.0
    %564 = vmatpush1.msra.mxu0 0.0
    %565 = vmatprep.subr.mxu0 0.0
    %566 = vmatpush1.msra.mxu0 0.0
    %567 = vmatprep.subr.mxu0 0.0
    %568 = vmatpush1.msra.mxu0 0.0
    %569 = vmatprep.subr.mxu0 0.0
    %570 = vmatpush1.msra.mxu0 0.0
    %571 = vmatprep.subr.mxu0 0.0
    %572 = vmatpush1.msra.mxu0 0.0
    %573 = vmatprep.subr.mxu0 0.0
    %574 = vmatpush1.msra.mxu0 0.0
    %575 = vmatprep.subr.mxu0 0.0
    %576 = vmatpush1.msra.mxu0 0.0
    %577 = vmatprep.subr.mxu0 0.0
    %578 = vmatpush1.msra.mxu0 0.0
    %579 = vmatprep.subr.mxu0 0.0
    %580 = vmatpush1.msra.mxu0 0.0
    %581 = vmatprep.subr.mxu0 0.0
    %582 = vmatpush1.msra.mxu0 0.0
    %583 = vmatprep.subr.mxu0 0.0
    %584 = vmatpush1.msra.mxu0 0.0
    %585 = vmatprep.subr.mxu0 0.0
    %586 = vmatpush1.msra.mxu0 0.0
    %587 = vmatprep.subr.mxu0 0.0
    %588 = vmatpush1.msra.mxu0 0.0
    %589 = vmatprep.subr.mxu0 0.0
    %590 = vmatpush1.msra.mxu0 0.0
    %591 = vmatprep.subr.mxu0 0.0
    %592 = vmatpush1.msra.mxu0 0.0
    %593 = vmatprep.subr.mxu0 0.0
    %594 = vmatpush1.msra.mxu0 0.0
    %595 = vmatprep.subr.mxu0 0.0
    %596 = vmatpush1.msra.mxu0 0.0
    %597 = vmatprep.subr.mxu0 0.0
    %598 = vmatpush1.msra.mxu0 0.0
    %599 = vmatprep.subr.mxu0 0.0
    %600 = vmatpush1.msra.mxu0 0.0
    %601 = vmatprep.subr.mxu0 0.0
    %602 = vmatpush1.msra.mxu0 0.0
    %603 = vmatprep.subr.mxu0 0.0
    %604 = vmatpush1.msra.mxu0 0.0
    %605 = vmatprep.subr.mxu0 0.0
    %606 = vmatpush1.msra.mxu0 0.0
    %607 = vmatprep.subr.mxu0 0.0
    %608 = vmatpush1.msra.mxu0 0.0
    %609 = vmatprep.subr.mxu0 0.0
    %610 = vmatpush1.msra.mxu0 0.0
    %611 = vmatprep.mubr.f32.mxu0 0.0
    %612 = vmatmul.mubr.f32.gmra.mrb[0].mxu0 %v545
    %v613 = vpop.f32.mrb[0].mxu0
    %v614 = vadd.f32 0.0, %v613
    %v615 = vpop.f32.mrb[0].mxu0
    %616 = vdwg.mxu0
    %v617 = vxor.u32 %v614, 2147483648
    %v618 = vmul.f32 %v617, 1.442695
    %v619 = vpow.pop %v618
    %v620 = vadd.f32 %v619, 1.0
    %v621 = vrcp.pop %v620
    %v622 = vmul.f32 1.0, %v621
    %v623 = vld [vmem:[#allocation13] sm:$0xff]
    %v625 = vsel %vm543, %v623, 0
    %627 = vmatprep.subr.mxu0 0.0
    %628 = vmatpush1.msra.mxu0 %v540
    %629 = vmatprep.subr.mxu0 0.0
    %630 = vmatpush1.msra.mxu0 %v541
    %631 = vmatprep.subr.mxu0 0.0
    %632 = vmatpush1.msra.mxu0 0.0
    %633 = vmatprep.subr.mxu0 0.0
    %634 = vmatpush1.msra.mxu0 0.0
    %635 = vmatprep.subr.mxu0 0.0
    %636 = vmatpush1.msra.mxu0 0.0
    %637 = vmatprep.subr.mxu0 0.0
    %638 = vmatpush1.msra.mxu0 0.0
    %639 = vmatprep.subr.mxu0 0.0
    %640 = vmatpush1.msra.mxu0 0.0
    %641 = vmatprep.subr.mxu0 0.0
    %642 = vmatpush1.msra.mxu0 0.0
    %643 = vmatprep.subr.mxu0 0.0
    %644 = vmatpush1.msra.mxu0 0.0
    %645 = vmatprep.subr.mxu0 0.0
    %646 = vmatpush1.msra.mxu0 0.0
    %647 = vmatprep.subr.mxu0 0.0
    %648 = vmatpush1.msra.mxu0 0.0
    %649 = vmatprep.subr.mxu0 0.0
    %650 = vmatpush1.msra.mxu0 0.0
    %651 = vmatprep.subr.mxu0 0.0
    %652 = vmatpush1.msra.mxu0 0.0
    %653 = vmatprep.subr.mxu0 0.0
    %654 = vmatpush1.msra.mxu0 0.0
    %655 = vmatprep.subr.mxu0 0.0
    %656 = vmatpush1.msra.mxu0 0.0
    %657 = vmatprep.subr.mxu0 0.0
    %658 = vmatpush1.msra.mxu0 0.0
    %659 = vmatprep.subr.mxu0 0.0
    %660 = vmatpush1.msra.mxu0 0.0
    %661 = vmatprep.subr.mxu0 0.0
    %662 = vmatpush1.msra.mxu0 0.0
    %663 = vmatprep.subr.mxu0 0.0
    %664 = vmatpush1.msra.mxu0 0.0
    %665 = vmatprep.subr.mxu0 0.0
    %666 = vmatpush1.msra.mxu0 0.0
    %667 = vmatprep.subr.mxu0 0.0
    %668 = vmatpush1.msra.mxu0 0.0
    %669 = vmatprep.subr.mxu0 0.0
    %670 = vmatpush1.msra.mxu0 0.0
    %671 = vmatprep.subr.mxu0 0.0
    %672 = vmatpush1.msra.mxu0 0.0
    %673 = vmatprep.subr.mxu0 0.0
    %674 = vmatpush1.msra.mxu0 0.0
    %675 = vmatprep.subr.mxu0 0.0
    %676 = vmatpush1.msra.mxu0 0.0
    %677 = vmatprep.subr.mxu0 0.0
    %678 = vmatpush1.msra.mxu0 0.0
    %679 = vmatprep.subr.mxu0 0.0
    %680 = vmatpush1.msra.mxu0 0.0
    %681 = vmatprep.subr.mxu0 0.0
    %682 = vmatpush1.msra.mxu0 0.0
    %683 = vmatprep.subr.mxu0 0.0
    %684 = vmatpush1.msra.mxu0 0.0
    %685 = vmatprep.subr.mxu0 0.0
    %686 = vmatpush1.msra.mxu0 0.0
    %687 = vmatprep.subr.mxu0 0.0
    %688 = vmatpush1.msra.mxu0 0.0
    %689 = vmatprep.subr.mxu0 0.0
    %690 = vmatpush1.msra.mxu0 0.0
    %691 = vmatprep.mubr.f32.mxu0 0.0
    %692 = vmatmul.mubr.f32.gmra.mrb[0].mxu0 %v625
    %v693 = vpop.f32.mrb[0].mxu0
    %v694 = vadd.f32 0.0, %v693
    %v695 = vpop.f32.mrb[0].mxu0
    %696 = vdwg.mxu0
    %v697 = vxor.u32 %v694, 2147483648
    %v698 = vmul.f32 %v697, 1.442695
    %v699 = vpow.pop %v698
    %v700 = vadd.f32 %v699, 1.0
    %v701 = vrcp.pop %v700
    %v702 = vmul.f32 1.0, %v701
    %v703 = vld [vmem:[#allocation14] sm:$0xff]
    %v704 = vld [vmem:[#allocation14 + $0x8] sm:$0xff]
    %v705 = vld [vmem:[#allocation14 + $0x10] sm:$0xff]
    %v706 = vld [vmem:[#allocation14 + $0x18] sm:$0xff]
    %v708 = vsel %vm543, %v622, 0
    %710 = vmatprep.subr.mxu0 %v704
    %711 = vmatpush1.msra.mxu0 %v703
    %712 = vmatprep.subr.mxu0 %v706
    %713 = vmatpush1.msra.mxu0 %v705
    %714 = vmatprep.subr.mxu0 0.0
    %715 = vmatpush1.msra.mxu0 0.0
    %716 = vmatprep.subr.mxu0 0.0
    %717 = vmatpush1.msra.mxu0 0.0
    %718 = vmatprep.subr.mxu0 0.0
    %719 = vmatpush1.msra.mxu0 0.0
    %720 = vmatprep.subr.mxu0 0.0
    %721 = vmatpush1.msra.mxu0 0.0
    %722 = vmatprep.subr.mxu0 0.0
    %723 = vmatpush1.msra.mxu0 0.0
    %724 = vmatprep.subr.mxu0 0.0
    %725 = vmatpush1.msra.mxu0 0.0
    %726 = vmatprep.subr.mxu0 0.0
    %727 = vmatpush1.msra.mxu0 0.0
    %728 = vmatprep.subr.mxu0 0.0
    %729 = vmatpush1.msra.mxu0 0.0
    %730 = vmatprep.subr.mxu0 0.0
    %731 = vmatpush1.msra.mxu0 0.0
    %732 = vmatprep.subr.mxu0 0.0
    %733 = vmatpush1.msra.mxu0 0.0
    %734 = vmatprep.subr.mxu0 0.0
    %735 = vmatpush1.msra.mxu0 0.0
    %736 = vmatprep.subr.mxu0 0.0
    %737 = vmatpush1.msra.mxu0 0.0
    %738 = vmatprep.subr.mxu0 0.0
    %739 = vmatpush1.msra.mxu0 0.0
    %740 = vmatprep.subr.mxu0 0.0
    %741 = vmatpush1.msra.mxu0 0.0
    %742 = vmatprep.subr.mxu0 0.0
    %743 = vmatpush1.msra.mxu0 0.0
    %744 = vmatprep.subr.mxu0 0.0
    %745 = vmatpush1.msra.mxu0 0.0
    %746 = vmatprep.subr.mxu0 0.0
    %747 = vmatpush1.msra.mxu0 0.0
    %748 = vmatprep.subr.mxu0 0.0
    %749 = vmatpush1.msra.mxu0 0.0
    %750 = vmatprep.subr.mxu0 0.0
    %751 = vmatpush1.msra.mxu0 0.0
    %752 = vmatprep.subr.mxu0 0.0
    %753 = vmatpush1.msra.mxu0 0.0
    %754 = vmatprep.subr.mxu0 0.0
    %755 = vmatpush1.msra.mxu0 0.0
    %756 = vmatprep.subr.mxu0 0.0
    %757 = vmatpush1.msra.mxu0 0.0
    %758 = vmatprep.subr.mxu0 0.0
    %759 = vmatpush1.msra.mxu0 0.0
    %760 = vmatprep.subr.mxu0 0.0
    %761 = vmatpush1.msra.mxu0 0.0
    %762 = vmatprep.subr.mxu0 0.0
    %763 = vmatpush1.msra.mxu0 0.0
    %764 = vmatprep.subr.mxu0 0.0
    %765 = vmatpush1.msra.mxu0 0.0
    %766 = vmatprep.subr.mxu0 0.0
    %767 = vmatpush1.msra.mxu0 0.0
    %768 = vmatprep.subr.mxu0 0.0
    %769 = vmatpush1.msra.mxu0 0.0
    %770 = vmatprep.subr.mxu0 0.0
    %771 = vmatpush1.msra.mxu0 0.0
    %772 = vmatprep.subr.mxu0 0.0
    %773 = vmatpush1.msra.mxu0 0.0
    %774 = vmatprep.mubr.f32.mxu0 0.0
    %775 = vmatmul.mubr.f32.gmra.mrb[0].mxu0 %v708
    %v776 = vpop.f32.mrb[0].mxu0
    %v777 = vadd.f32 0.0, %v776
    %v778 = vpop.f32.mrb[0].mxu0
    %v779 = vadd.f32 0.0, %v778
    %780 = vdwg.mxu0
    %v781 = vld [vmem:[#allocation16] sm:$0xff]
    %v782 = vld [vmem:[#allocation16 + $0x8] sm:$0xff]
    %v783 = vld [vmem:[#allocation16 + $0x10] sm:$0xff]
    %v784 = vld [vmem:[#allocation16 + $0x18] sm:$0xff]
    %v786 = vsel %vm543, %v702, 0
    %788 = vmatprep.subr.mxu0 %v782
    %789 = vmatpush1.msra.mxu0 %v781
    %790 = vmatprep.subr.mxu0 %v784
    %791 = vmatpush1.msra.mxu0 %v783
    %792 = vmatprep.subr.mxu0 0.0
    %793 = vmatpush1.msra.mxu0 0.0
    %794 = vmatprep.subr.mxu0 0.0
    %795 = vmatpush1.msra.mxu0 0.0
    %796 = vmatprep.subr.mxu0 0.0
    %797 = vmatpush1.msra.mxu0 0.0
    %798 = vmatprep.subr.mxu0 0.0
    %799 = vmatpush1.msra.mxu0 0.0
    %800 = vmatprep.subr.mxu0 0.0
    %801 = vmatpush1.msra.mxu0 0.0
    %802 = vmatprep.subr.mxu0 0.0
    %803 = vmatpush1.msra.mxu0 0.0
    %804 = vmatprep.subr.mxu0 0.0
    %805 = vmatpush1.msra.mxu0 0.0
    %806 = vmatprep.subr.mxu0 0.0
    %807 = vmatpush1.msra.mxu0 0.0
    %808 = vmatprep.subr.mxu0 0.0
    %809 = vmatpush1.msra.mxu0 0.0
    %810 = vmatprep.subr.mxu0 0.0
    %811 = vmatpush1.msra.mxu0 0.0
    %812 = vmatprep.subr.mxu0 0.0
    %813 = vmatpush1.msra.mxu0 0.0
    %814 = vmatprep.subr.mxu0 0.0
    %815 = vmatpush1.msra.mxu0 0.0
    %816 = vmatprep.subr.mxu0 0.0
    %817 = vmatpush1.msra.mxu0 0.0
    %818 = vmatprep.subr.mxu0 0.0
    %819 = vmatpush1.msra.mxu0 0.0
    %820 = vmatprep.subr.mxu0 0.0
    %821 = vmatpush1.msra.mxu0 0.0
    %822 = vmatprep.subr.mxu0 0.0
    %823 = vmatpush1.msra.mxu0 0.0
    %824 = vmatprep.subr.mxu0 0.0
    %825 = vmatpush1.msra.mxu0 0.0
    %826 = vmatprep.subr.mxu0 0.0
    %827 = vmatpush1.msra.mxu0 0.0
    %828 = vmatprep.subr.mxu0 0.0
    %829 = vmatpush1.msra.mxu0 0.0
    %830 = vmatprep.subr.mxu0 0.0
    %831 = vmatpush1.msra.mxu0 0.0
    %832 = vmatprep.subr.mxu0 0.0
    %833 = vmatpush1.msra.mxu0 0.0
    %834 = vmatprep.subr.mxu0 0.0
    %835 = vmatpush1.msra.mxu0 0.0
    %836 = vmatprep.subr.mxu0 0.0
    %837 = vmatpush1.msra.mxu0 0.0
    %838 = vmatprep.subr.mxu0 0.0
    %839 = vmatpush1.msra.mxu0 0.0
    %840 = vmatprep.subr.mxu0 0.0
    %841 = vmatpush1.msra.mxu0 0.0
    %842 = vmatprep.subr.mxu0 0.0
    %843 = vmatpush1.msra.mxu0 0.0
    %844 = vmatprep.subr.mxu0 0.0
    %845 = vmatpush1.msra.mxu0 0.0
    %846 = vmatprep.subr.mxu0 0.0
    %847 = vmatpush1.msra.mxu0 0.0
    %848 = vmatprep.subr.mxu0 0.0
    %849 = vmatpush1.msra.mxu0 0.0
    %850 = vmatprep.subr.mxu0 0.0
    %851 = vmatpush1.msra.mxu0 0.0
    %852 = vmatprep.mubr.f32.mxu0 0.0
    %853 = vmatmul.mubr.f32.gmra.mrb[0].mxu0 %v786
    %v854 = vpop.f32.mrb[0].mxu0
    %v855 = vadd.f32 0.0, %v854
    %v856 = vpop.f32.mrb[0].mxu0
    %v857 = vadd.f32 0.0, %v856
    %858 = vdwg.mxu0
    %v859 = vmul.f32 %v149, %v777
    %v860 = vmul.f32 %v150, %v779
    %v861 = vmul.f32 %v859, %v855
    %v862 = vmul.f32 %v860, %v857
    %863 = vst [vmem:[#allocation17] sm:$0xff] %v861
    %864 = vst [vmem:[#allocation17 + $0x8] sm:$0xff] %v862
    // Predicated region
    $region74: #{tpu_custom_call.1} parent=1 // pred_check
      _
    $region75: #{tpu_custom_call.1} parent=1 // pred_check_branch
      %866 = sbr.rel (0) target = $region77
    $region76: #{tpu_custom_call.1} parent=1 // pred_region
      %s868 = ssub.s32 256, 256
      %869 = vsyncadd [#allocation4], %s868
      %s871 = sshll.u32 [#allocation17], 4
      %s872 = int_to_ptr.vmem [resolvable:$true] %s871
      %874 = dma.vmem_to_hbm [thread:$0]  %s872, 256, %s9, [#allocation4]
    $region77: #{tpu_custom_call.1} parent=1 // pred_fallthru
      _
    // Predicated region
    $region78: #{tpu_custom_call.1} parent=1 // pred_check
      _
    $region79: #{tpu_custom_call.1} parent=1 // pred_check_branch
      %876 = sbr.rel (0) target = $region81
    $region80: #{tpu_custom_call.1} parent=1 // pred_region
      %877 = dma.done [#allocation4], 256
    $region81: #{tpu_custom_call.1} parent=1 // pred_fallthru
      _
    %878 = vsyncpa [#allocation3], 1
    %879 = vsyncpa [#allocation6], 1
    %880 = vsyncpa [#allocation9], 1
    %881 = vsyncpa [#allocation12], 1
    %882 = vsyncpa [#allocation15], 1
    %883 = vsyncpa [#allocation4], 1

</llo_original>
